<compile_context>
chip_gen: v7x
topology: tpu7x:2x2x1
jax: 0.10.0
libtpu: 0.0.40
codegen_flags: <defaults>
</compile_context>

<pallas_src>
import jax
import jax.numpy as jnp
from jax.experimental import pallas as pl
from jax.experimental.pallas import tpu as pltpu


def _round_up(x, m):
    return (x + m - 1) // m * m


def _sublane_mult(dtype):
    # f32 -> 8, bf16 -> 16, int8/fp8 -> 32 sublane multiple.
    return max(8, 32 // jnp.dtype(dtype).itemsize)


def _center_loss_kernel(feat_ref, cent_ref, out_ref):
    # Whole (tile_rows, Dp) tile, fully vectorized.  Padded rows/lanes are zero
    # in BOTH inputs, so they contribute nothing to the sum of squares.
    f = feat_ref[...].astype(jnp.float32)
    c = cent_ref[...].astype(jnp.float32)
    d = f - c
    partial = jnp.sum(d * d)                      # one XLU reduce per tile

    rr = jax.lax.broadcasted_iota(jnp.int32, out_ref.shape, 0)
    cc = jax.lax.broadcasted_iota(jnp.int32, out_ref.shape, 1)
    out_ref[...] = jnp.where((rr == 0) & (cc == 0), partial, 0.0).astype(out_ref.dtype)


def center_loss(label, feat, centers, size_average=True):
    """Pallas implementation of CenterLoss.forward(label, feat)."""
    batch = feat.shape[0]
    feat2d = feat.reshape(batch, -1)
    num_classes, feat_dim = centers.shape
    if feat2d.shape[1] != feat_dim:
        raise ValueError(
            "Center's dim: {0} should be equal to input feature's dim: {1}".format(
                feat_dim, feat2d.shape[1]))

    # Wrapper-side gather (review Option B): stream the gathered rows exactly
    # like feat.  Costs one extra B*D HBM write+read, but removes per-row DMAs.
    label_i = label.astype(jnp.int32).reshape(-1)
    centers_batch = jnp.take(centers, label_i, axis=0)

    it_feat = jnp.dtype(feat2d.dtype).itemsize
    it_cent = jnp.dtype(centers_batch.dtype).itemsize
    sub = max(_sublane_mult(feat2d.dtype), _sublane_mult(centers_batch.dtype))

    # Lane-pad the feature dim to a multiple of 128 (unmasked full-width ops).
    d_pad = _round_up(feat_dim, 128)

    # Tile sizing: <= ~6 MiB per streamed buffer (2 inputs x 2 pipeline buffers
    # stays well inside v7x's 32 MiB scoped VMEM), rows capped at 1024.
    per_buffer_cap = 6 * 1024 * 1024
    bytes_per_row = d_pad * max(it_feat, it_cent)
    cap_rows = max(sub, (per_buffer_cap // max(bytes_per_row, 1)) // sub * sub)
    tile_rows = max(sub, min(1024, cap_rows))
    # Prefer >= 2 tiles so v7x's second TensorCore gets half the batch.
    half_rows = _round_up(-(-batch // 2), sub)
    tile_rows = min(tile_rows, max(sub, half_rows))
    # TODO(synk): for feat_dim so large that even `sub` rows exceed the VMEM
    # budget, add a second grid axis tiling over D.

    padded_batch = _round_up(batch, tile_rows)
    num_tiles = padded_batch // tile_rows

    pad_b = padded_batch - batch
    pad_d = d_pad - feat_dim
    if pad_b or pad_d:
        feat2d = jnp.pad(feat2d, ((0, pad_b), (0, pad_d)))
        centers_batch = jnp.pad(centers_batch, ((0, pad_b), (0, pad_d)))

    cost = pl.CostEstimate(
        flops=3 * padded_batch * d_pad,
        transcendentals=0,
        bytes_accessed=(padded_batch * d_pad * (it_feat + it_cent)
                        + num_tiles * 8 * 128 * 4),
    )

    partials = pl.pallas_call(
        _center_loss_kernel,
        out_shape=jax.ShapeDtypeStruct((num_tiles * 8, 128), jnp.float32),
        grid=(num_tiles,),
        in_specs=[
            pl.BlockSpec((tile_rows, d_pad), lambda i: (i, 0)),   # feat tile
            pl.BlockSpec((tile_rows, d_pad), lambda i: (i, 0)),   # gathered centers tile
        ],
        out_specs=pl.BlockSpec((8, 128), lambda i: (i, 0)),
        compiler_params=pltpu.CompilerParams(
            dimension_semantics=("parallel",),
            vmem_limit_bytes=32 * 1024 * 1024,
        ),
        cost_estimate=cost,
    )(feat2d, centers_batch)

    # Tiny final reduction + scaling outside the kernel (keeps per-tile partials
    # independent for megacore and keeps batch-size constants out of the kernel).
    denom = float(batch if size_average else 1)
    return jnp.sum(partials) * 0.5 / denom


if __name__ == "__main__":
    def reference(feat, label, centers, size_average=True):
        b = feat.shape[0]
        f2 = feat.reshape(b, -1).astype(jnp.float32)
        cb = centers.astype(jnp.float32)[label]
        denom = b if size_average else 1
        return jnp.sum((f2 - cb) ** 2) / 2.0 / denom

    key = jax.random.PRNGKey(0)

    # Case 1: lane-dense feature dim, batch equal to one sublane tile.
    B, D, C = 8, 128, 10
    k1, k2, k3, key = jax.random.split(key, 4)
    feat = jax.random.normal(k1, (B, D), dtype=jnp.float32)
    label = jax.random.randint(k2, (B,), 0, C, dtype=jnp.int32)
    centers = jax.random.normal(k3, (C, D), dtype=jnp.float32)
    loss = jax.block_until_ready(center_loss(label, feat, centers))
    ref = reference(feat, label, centers)
    assert jnp.allclose(loss, ref, rtol=1e-5, atol=1e-5), (loss, ref)

    # Case 2: ragged batch and D < 128 (exercises batch + lane padding).
    B2, D2, C2 = 6, 32, 7
    k1, k2, k3, key = jax.random.split(key, 4)
    feat2 = jax.random.normal(k1, (B2, D2), dtype=jnp.float32)
    label2 = jax.random.randint(k2, (B2,), 0, C2, dtype=jnp.int32)
    centers2 = jax.random.normal(k3, (C2, D2), dtype=jnp.float32)
    loss2 = jax.block_until_ready(center_loss(label2, feat2, centers2))
    ref2 = reference(feat2, label2, centers2)
    assert jnp.allclose(loss2, ref2, rtol=1e-5, atol=1e-5), (loss2, ref2)

    # Case 3: multi-dim features (flattened in the wrapper, like feat.view(B,-1)).
    B3, C3 = 2, 5
    k1, k2, k3, key = jax.random.split(key, 4)
    feat3 = jax.random.normal(k1, (B3, 4, 4, 2), dtype=jnp.float32)   # feat_dim = 32
    label3 = jax.random.randint(k2, (B3,), 0, C3, dtype=jnp.int32)
    centers3 = jax.random.normal(k3, (C3, 32), dtype=jnp.float32)
    loss3 = jax.block_until_ready(center_loss(label3, feat3, centers3))
    ref3 = reference(feat3, label3, centers3)
    assert jnp.allclose(loss3, ref3, rtol=1e-5, atol=1e-5), (loss3, ref3)

    # Case 4: bf16 features / centers (in-kernel upcast, 16-sublane tiles).
    B4, D4, C4 = 16, 256, 12
    k1, k2, k3, key = jax.random.split(key, 4)
    feat4 = jax.random.normal(k1, (B4, D4), dtype=jnp.float32).astype(jnp.bfloat16)
    label4 = jax.random.randint(k2, (B4,), 0, C4, dtype=jnp.int32)
    centers4 = jax.random.normal(k3, (C4, D4), dtype=jnp.float32).astype(jnp.bfloat16)
    loss4 = jax.block_until_ready(center_loss(label4, feat4, centers4))
    ref4 = reference(feat4, label4, centers4)
    assert jnp.allclose(loss4, ref4, rtol=2e-2, atol=2e-2), (loss4, ref4)

    print("KERNEL_OK")
</pallas_src>

<mosaic_0001>
module attributes {stable_mosaic.version = 11 : i64} {
  func.func @_center_loss_kernel(%arg0: i32, %arg1: memref<8x128xf32, #tpu.memory_space<vmem>>, %arg2: memref<8x128xf32, #tpu.memory_space<vmem>>, %arg3: memref<8x128xf32, #tpu.memory_space<vmem>>) attributes {dimension_semantics = [#tpu.dimension_semantics<parallel>], iteration_bounds = array<i64: 1>, scalar_prefetch = 0 : i64, scratch_operands = 0 : i64, tpu.core_type = #tpu.core_type<tc>, window_params = [{transform_indices = @transform_0, window_bounds = array<i64: 8, 128>}, {transform_indices = @transform_1, window_bounds = array<i64: 8, 128>}, {transform_indices = @transform_2, window_bounds = array<i64: 8, 128>}]} {
    %c0 = arith.constant 0 : index
    %c0_0 = arith.constant 0 : index
    %0 = vector.load %arg1[%c0, %c0_0] : memref<8x128xf32, #tpu.memory_space<vmem>>, vector<8x128xf32>
    %c0_1 = arith.constant 0 : index
    %c0_2 = arith.constant 0 : index
    %1 = vector.load %arg2[%c0_1, %c0_2] : memref<8x128xf32, #tpu.memory_space<vmem>>, vector<8x128xf32>
    %2 = arith.subf %0, %1 : vector<8x128xf32>
    %3 = arith.mulf %2, %2 : vector<8x128xf32>
    %4 = vector.shape_cast %3 : vector<8x128xf32> to vector<1x8x128xf32>
    %cst = arith.constant dense<0.000000e+00> : vector<1xf32>
    %5 = vector.multi_reduction <add>, %4, %cst [1, 2] : vector<1x8x128xf32> to vector<1xf32>
    %6 = vector.shape_cast %5 : vector<1xf32> to vector<1x1x1xf32>
    %7 = vector.extract %6[0, 0, 0] : f32 from vector<1x1x1xf32>
    %8 = tpu.iota {dimensions = array<i32: 0>} : vector<8x128xi32>
    %9 = tpu.iota {dimensions = array<i32: 1>} : vector<8x128xi32>
    %c0_i32 = arith.constant 0 : i32
    %10 = vector.broadcast %c0_i32 : i32 to vector<8x128xi32>
    %11 = arith.cmpi eq, %8, %10 : vector<8x128xi32>
    %c0_i32_3 = arith.constant 0 : i32
    %12 = vector.broadcast %c0_i32_3 : i32 to vector<8x128xi32>
    %13 = arith.cmpi eq, %9, %12 : vector<8x128xi32>
    %14 = arith.andi %11, %13 : vector<8x128xi1>
    %cst_4 = arith.constant 0.000000e+00 : f32
    %15 = vector.broadcast %7 : f32 to vector<8x128xf32>
    %16 = vector.broadcast %cst_4 : f32 to vector<8x128xf32>
    %17 = arith.select %14, %15, %16 : vector<8x128xi1>, vector<8x128xf32>
    %c0_5 = arith.constant 0 : index
    %c0_6 = arith.constant 0 : index
    %18 = vector.load %arg3[%c0_5, %c0_6] : memref<8x128xf32, #tpu.memory_space<vmem>>, vector<8x128xf32>
    tpu.vector_store %arg3[%c0_5, %c0_6], %17 {strides = array<i32>} : memref<8x128xf32, #tpu.memory_space<vmem>>, vector<8x128xf32>,
    return
  }
  func.func @transform_0(%arg0: i32) -> (i32, i32) {
    %c0_i32 = arith.constant 0 : i32
    %c0_i32_0 = arith.constant 0 : i32
    return %arg0, %c0_i32 : i32, i32
  }
  func.func @transform_1(%arg0: i32) -> (i32, i32) {
    %c0_i32 = arith.constant 0 : i32
    %c0_i32_0 = arith.constant 0 : i32
    return %arg0, %c0_i32 : i32, i32
  }
  func.func @transform_2(%arg0: i32) -> (i32, i32) {
    %c0_i32 = arith.constant 0 : i32
    %c0_i32_0 = arith.constant 0 : i32
    return %arg0, %c0_i32 : i32, i32
  }
}

</mosaic_0001>

<llo_original>
// kernel: tpu_custom_call.1
$region0: #{tpu_custom_call.1}
  #allocation0 [shape = 'u32[]', space=smem, size = 0x4, offset = 0x4, fixed_abs, tag = 'smem constant byte address 0x4 - core index']
  #allocation1 [shape = 'u32[144,128]{1,0:T(1,128)}', space=vmem, size = 0x12000, scoped, tag = 'internal scratch']
  %s0 = inlined_call_operand.hbm [shape: f32[8,128], index: 0, kind: input, shape index: {}]
  %s1 = inlined_call_operand.hbm [shape: f32[8,128], index: 1, kind: input, shape index: {}]
  %s2 = inlined_call_operand.hbm [shape: f32[8,128], index: 2, kind: output, shape index: {}]
  %s3 = sld [smem:[#allocation0]]
  $region26: #{tpu_custom_call.1} parent=0
    _
  %s5 = ssub.s32 1, %s3
  %s6 = scalar_select 0, %s5, %s3
  $region1: #{tpu_custom_call.1} parent=0
    #allocation2 [shape = 'u8[4096]{0}', space=vmem, size = 0x1000, scoped, tag = 'input window, operand 0, single buffered']
    #allocation3 [shape = 's32[1]{0}', space=sflag, size = 0x4, scoped, tag = 'scoped memory for tpu_custom_call.1']
    #allocation4 [shape = 's32[1]{0}', space=sflag, size = 0x4, scoped, tag = 'scoped memory for tpu_custom_call.1']
    #allocation5 [shape = 'u8[4096]{0}', space=vmem, size = 0x1000, scoped, tag = 'input window, operand 1, single buffered']
    #allocation6 [shape = 's32[1]{0}', space=sflag, size = 0x4, scoped, tag = 'scoped memory for tpu_custom_call.1']
    #allocation7 [shape = 'u8[4096]{0}', space=vmem, size = 0x1000, scoped, tag = 'output window, operand 0, single buffered']
    %7 = vsyncpa [#allocation3], 0
    %8 = vsyncpa [#allocation6], 0
    %9 = vsyncpa [#allocation4], 0
    // Predicated region
    $region2: #{tpu_custom_call.1} parent=1 // pred_check
      _
    $region3: #{tpu_custom_call.1} parent=1 // pred_check_branch
      %11 = sbr.rel (0) target = $region5
    $region4: #{tpu_custom_call.1} parent=1 // pred_region
      %s13 = ssub.s32 128, 128
      %14 = vsyncadd [#allocation3], %s13
      %s16 = sshll.u32 [#allocation2], 4
      %s17 = int_to_ptr.vmem [resolvable:$true] %s16
      %19 = dma.hbm_to_vmem [thread:$0]  %s0, 128, %s17, [#allocation3]
    $region5: #{tpu_custom_call.1} parent=1 // pred_fallthru
      _
    // Predicated region
    $region6: #{tpu_custom_call.1} parent=1 // pred_check
      _
    $region7: #{tpu_custom_call.1} parent=1 // pred_check_branch
      %21 = sbr.rel (0) target = $region9
    $region8: #{tpu_custom_call.1} parent=1 // pred_region
      %s23 = ssub.s32 128, 128
      %24 = vsyncadd [#allocation6], %s23
      %s26 = sshll.u32 [#allocation5], 4
      %s27 = int_to_ptr.vmem [resolvable:$true] %s26
      %29 = dma.hbm_to_vmem [thread:$0]  %s1, 128, %s27, [#allocation6]
    $region9: #{tpu_custom_call.1} parent=1 // pred_fallthru
      _
    // Predicated region
    $region10: #{tpu_custom_call.1} parent=1 // pred_check
      _
    $region11: #{tpu_custom_call.1} parent=1 // pred_check_branch
      %31 = sbr.rel (0) target = $region13
    $region12: #{tpu_custom_call.1} parent=1 // pred_region
      %32 = dma.done [#allocation3], 128
    $region13: #{tpu_custom_call.1} parent=1 // pred_fallthru
      _
    // Predicated region
    $region14: #{tpu_custom_call.1} parent=1 // pred_check
      _
    $region15: #{tpu_custom_call.1} parent=1 // pred_check_branch
      %34 = sbr.rel (0) target = $region17
    $region16: #{tpu_custom_call.1} parent=1 // pred_region
      %35 = dma.done [#allocation6], 128
    $region17: #{tpu_custom_call.1} parent=1 // pred_fallthru
      _
    %v36 = vld [vmem:[#allocation2] sm:$0xff]
    %v37 = vld [vmem:[#allocation5] sm:$0xff]
    %v38 = vsub.f32 %v36, %v37
    %v39 = vmul.f32 %v38, %v38
    %40 = vadd.xlane.f32.xlu0 %v39
    %v41 = vpop.xlane.xlu0 %40
    %v42 = vrot.slane %v41, 4
    %v43 = vadd.f32 %v41, %v42
    %v44 = vrot.slane %v43, 2
    %v45 = vadd.f32 %v43, %v44
    %v46 = vrot.slane %v45, 1
    %v47 = vadd.f32 %v45, %v46
    %s48 = vtos %v47
    %v49 = vlaneseq
    %v50 = vshrl.u32 %v49, 7
    %v51 = vlaneseq
    %v52 = vand.u32 %v51, 127
    %vm53 = vcmp.eq.s32.totalorder %v50, 0
    %vm54 = vcmp.eq.s32.totalorder %v52, 0
    %vm55 = vmand %vm53, %vm54
    %v56 = vstv %s48
    %v57 = vsel %vm55, %v56, 0.0
    %58 = vst [vmem:[#allocation7] sm:$0xff] %v57
    // Predicated region
    $region18: #{tpu_custom_call.1} parent=1 // pred_check
      _
    $region19: #{tpu_custom_call.1} parent=1 // pred_check_branch
      %60 = sbr.rel (0) target = $region21
    $region20: #{tpu_custom_call.1} parent=1 // pred_region
      %s62 = ssub.s32 128, 128
      %63 = vsyncadd [#allocation4], %s62
      %s65 = sshll.u32 [#allocation7], 4
      %s66 = int_to_ptr.vmem [resolvable:$true] %s65
      %68 = dma.vmem_to_hbm [thread:$0]  %s66, 128, %s2, [#allocation4]
    $region21: #{tpu_custom_call.1} parent=1 // pred_fallthru
      _
    // Predicated region
    $region22: #{tpu_custom_call.1} parent=1 // pred_check
      _
    $region23: #{tpu_custom_call.1} parent=1 // pred_check_branch
      %70 = sbr.rel (0) target = $region25
    $region24: #{tpu_custom_call.1} parent=1 // pred_region
      %71 = dma.done [#allocation4], 128
    $region25: #{tpu_custom_call.1} parent=1 // pred_fallthru
      _
    %72 = vsyncpa [#allocation3], 1
    %73 = vsyncpa [#allocation6], 1
    %74 = vsyncpa [#allocation4], 1

</llo_original>
